<compile_context>
chip_gen: v7x
topology: tpu7x:2x2x1
jax: 0.10.0
libtpu: 0.0.40
codegen_flags: <defaults>
</compile_context>

<pallas_src>
import functools

import jax
import jax.numpy as jnp
from jax import lax
from jax.experimental import pallas as pl
from jax.experimental.pallas import tpu as pltpu

NEG_SLOPE = 0.01  # nn.LeakyReLU() default negative_slope


def _leaky_relu(x):
    return jnp.where(x >= 0, x, NEG_SLOPE * x)


def gat_subnet_kernel(x_ref, wth_ref, bh_ref, wto_ref, bo_ref, g_ref, o_ref,
                      *, compute_dtype):
    """Fused GATSubNet forward for one block of bB batch elements.

    x_ref:   (bB, N, C)            input features
    wth_ref: (H, C, hid)           per-head W^T (leading head axis)
    bh_ref:  (H, 1, hid)           per-head biases
    wto_ref: (H, hid, out_c)       out_att W^T split per head (row blocks of W2^T)
    bo_ref:  (1, out_c)            out_att bias
    g_ref:   (N, N)                graph adjacency
    o_ref:   (1, bB, N*out_c)      lane-dense output block
    """
    bB, N, C = x_ref.shape
    n_heads, _, hid_c = wth_ref.shape
    out_c = wto_ref.shape[-1]

    x = x_ref[...]                      # (bB, N, C) f32
    g = g_ref[...]                      # (N, N)

    def attention(h, bias):
        # h: (bB, N, D) f32, bias broadcastable to (bB, N, D).
        # Scores MUST stay f32: the `== 0` mask must match PyTorch's
        # masked_fill_(scores == 0, -1e16) exactly.
        s = jnp.einsum("bnd,bmd->bnm", h, h,
                       preferred_element_type=jnp.float32) * g[None]
        s = jnp.where(s == 0.0, jnp.float32(-1e16), s)
        m = jnp.max(s, axis=-1, keepdims=True)
        e = jnp.exp(s - m)
        denom = jnp.sum(e, axis=-1, keepdims=True)           # (bB, N, 1)
        # Normalize AFTER aggregation: (N, D) multiply instead of (N, N) divide.
        agg = jnp.einsum("bnm,bmd->bnd",
                         e.astype(compute_dtype), h.astype(compute_dtype),
                         preferred_element_type=jnp.float32)
        r = pl.reciprocal(denom, approx=True)                 # EUP vrcp (free slot)
        r = r * (2.0 - denom * r)                             # one Newton step
        return agg * r + bias

    xf = x.reshape(bB * N, C)

    def head_body(hd, h2_acc):
        # Leading-axis (sublane-cheap) indexing: no lane-offset slices.
        w = wth_ref[hd]                                       # (C, hid)
        h = jnp.dot(xf.astype(compute_dtype), w.astype(compute_dtype),
                    preferred_element_type=jnp.float32).reshape(bB, N, hid_c)
        head_out = attention(h, bh_ref[hd])                   # (bB, N, hid)
        a = _leaky_relu(head_out).reshape(bB * N, hid_c)
        # Accumulated per-head out-layer matmul == leaky(concat) @ W2^T.
        return h2_acc + jnp.dot(a.astype(compute_dtype),
                                wto_ref[hd].astype(compute_dtype),
                                preferred_element_type=jnp.float32)

    h2 = lax.fori_loop(0, n_heads, head_body,
                       jnp.zeros((bB * N, out_c), jnp.float32))
    h2 = h2.reshape(bB, N, out_c)

    out = _leaky_relu(attention(h2, bo_ref[...]))             # (bB, N, out_c)
    # Lane-dense store: last dim N*out_c instead of out_c.
    o_ref[...] = out.reshape(1, bB, N * out_c).astype(o_ref.dtype)


def _vmem_limit_bytes():
    """Generation-aware VMEM limit: ~60% of physical (64 MiB v7x, 128 MiB v5e/v6e)."""
    phys = 64 * 1024 * 1024  # conservative default (v7x per-TC VMEM)
    try:
        info = pltpu.get_tpu_info()
        phys = int(getattr(info, "vmem_capacity_bytes", phys))
    except Exception:
        pass
    return max(32 * 1024 * 1024, int(phys * 0.6))


def _pick_block_batch(B, N, hid_c, out_c, vmem_limit):
    """Batch elements per grid step.

    Aim for >= ~256 matmul rows, bounded by a VMEM budget for the per-batch-element
    f32 temporaries (only one head's (N, N) score/exp tensors are live at a time
    thanks to the fori_loop), dividing B evenly, and leaving >= 2 grid steps so both
    of v7x's TensorCores get work on the "parallel" batch axis.
    """
    rows_target = max(1, pl.cdiv(256, max(N, 1)))
    per_b = 4 * (4 * N * N + 2 * N * (hid_c + out_c))   # bytes of live f32 temps
    vmem_cap = max(1, (vmem_limit // 3) // max(per_b, 1))
    bb = max(1, min(B, rows_target, vmem_cap))
    if B >= 2:
        bb = min(bb, max(1, B // 2))     # keep >= 2 grid steps (v7x dual TC)
    while B % bb:
        bb -= 1
    return bb


def gat_subnet_forward(params, x, graph, *, compute_dtype=jnp.float32):
    """Fused Pallas GATSubNet forward.  x: (B, N, C), graph: (N, N)."""
    B, N, C = x.shape
    n_heads = len(params["heads"])
    hid_c = params["heads"][0]["W"].shape[0]
    out_c = params["out"]["W"].shape[0]

    # Per-head weights stacked on a leading axis (no lane-offset slices in-kernel).
    wth = jnp.stack([h["W"].T for h in params["heads"]], axis=0)          # (H, C, hid)
    bh = jnp.stack([h["b"].reshape(1, hid_c) for h in params["heads"]], 0)  # (H, 1, hid)
    # out_att W^T split per head: row blocks hd*hid:(hd+1)*hid of W2^T.
    wto = params["out"]["W"].T.reshape(n_heads, hid_c, out_c)             # (H, hid, out)
    bo = params["out"]["b"].reshape(1, out_c)

    vmem_limit = _vmem_limit_bytes()
    bB = _pick_block_batch(B, N, hid_c, out_c, vmem_limit)
    grid_b = B // bB

    kernel = functools.partial(gat_subnet_kernel, compute_dtype=compute_dtype)

    out_flat = pl.pallas_call(
        kernel,
        out_shape=jax.ShapeDtypeStruct((grid_b, bB, N * out_c), x.dtype),
        grid_spec=pltpu.PrefetchScalarGridSpec(
            num_scalar_prefetch=0,
            grid=(grid_b,),
            in_specs=[
                pl.BlockSpec((bB, N, C), lambda i: (i, 0, 0)),
                pl.BlockSpec((n_heads, C, hid_c), lambda i: (0, 0, 0)),
                pl.BlockSpec((n_heads, 1, hid_c), lambda i: (0, 0, 0)),
                pl.BlockSpec((n_heads, hid_c, out_c), lambda i: (0, 0, 0)),
                pl.BlockSpec((1, out_c), lambda i: (0, 0)),
                pl.BlockSpec((N, N), lambda i: (0, 0)),
            ],
            out_specs=pl.BlockSpec((1, bB, N * out_c), lambda i: (i, 0, 0)),
        ),
        compiler_params=pltpu.CompilerParams(
            dimension_semantics=("parallel",),
            vmem_limit_bytes=vmem_limit,
        ),
    )(x, wth, bh, wto, bo, graph)
    return out_flat.reshape(B, N, out_c)


def init_gat_subnet_params(key, in_c, hid_c, out_c, n_heads):
    """Normal init (like nn.init.normal_), scaled by 1/sqrt(fan_in) so the two
    stacked softmax layers stay well-conditioned for the numeric check below."""
    params = {"heads": []}
    for _ in range(n_heads):
        key, k1, k2 = jax.random.split(key, 3)
        params["heads"].append({
            "W": jax.random.normal(k1, (hid_c, in_c), jnp.float32) / jnp.sqrt(in_c),
            "b": jax.random.normal(k2, (hid_c,), jnp.float32),
        })
    key, k1, k2 = jax.random.split(key, 3)
    fan_in = hid_c * n_heads
    params["out"] = {
        "W": jax.random.normal(k1, (out_c, fan_in), jnp.float32) / jnp.sqrt(fan_in),
        "b": jax.random.normal(k2, (out_c,), jnp.float32),
    }
    return params


# ---------------- pure-JAX reference (correctness check only) ----------------
def _ref_gat_layer(x, W, b, graph):
    hp = jax.lax.Precision.HIGHEST
    h = jnp.einsum("bnc,oc->bno", x, W, precision=hp)
    s = jnp.einsum("bnh,bmh->bnm", h, h, precision=hp) * graph[None]
    s = jnp.where(s == 0.0, -1e16, s)
    attn = jax.nn.softmax(s, axis=2)
    return jnp.einsum("bnm,bmh->bnh", attn, h, precision=hp) + b


def _ref_forward(params, x, graph):
    outs = jnp.concatenate(
        [_ref_gat_layer(x, h["W"], h["b"], graph) for h in params["heads"]], axis=-1)
    outs = jax.nn.leaky_relu(outs, NEG_SLOPE)
    outs = _ref_gat_layer(outs, params["out"]["W"], params["out"]["b"], graph)
    return jax.nn.leaky_relu(outs, NEG_SLOPE)


if __name__ == "__main__":
    B, N, in_c, hid_c, out_c, n_heads = 2, 16, 8, 16, 8, 2   # N*out_c = 128 (lane-dense)

    key = jax.random.PRNGKey(0)
    key, kx, kg, kp = jax.random.split(key, 4)
    x = jax.random.normal(kx, (B, N, in_c), jnp.float32)
    adj = (jax.random.uniform(kg, (N, N)) < 0.4).astype(jnp.float32)
    graph = jnp.maximum(adj, jnp.eye(N, dtype=jnp.float32))  # adjacency with self loops

    params = init_gat_subnet_params(kp, in_c, hid_c, out_c, n_heads)

    out = gat_subnet_forward(params, x, graph)
    out = jax.block_until_ready(out)

    ref = _ref_forward(params, x, graph)
    assert out.shape == (B, N, out_c)
    # Tolerance covers MXU f32-via-bf16-pass accumulation differences vs. the
    # HIGHEST-precision reference through two stacked softmax layers.
    assert jnp.allclose(out, ref, atol=2e-2, rtol=2e-2), "mismatch vs JAX reference"

    print("KERNEL_OK")
</pallas_src>

<mosaic_0001>
module attributes {stable_mosaic.version = 11 : i64} {
  func.func @gat_subnet_kernel(%arg0: i32, %arg1: memref<1x16x8xf32, #tpu.memory_space<vmem>>, %arg2: memref<2x8x16xf32, #tpu.memory_space<vmem>>, %arg3: memref<2x1x16xf32, #tpu.memory_space<vmem>>, %arg4: memref<2x16x8xf32, #tpu.memory_space<vmem>>, %arg5: memref<1x8xf32, #tpu.memory_space<vmem>>, %arg6: memref<16x16xf32, #tpu.memory_space<vmem>>, %arg7: memref<1x1x128xf32, #tpu.memory_space<vmem>>) attributes {dimension_semantics = [#tpu.dimension_semantics<parallel>], iteration_bounds = array<i64: 2>, scalar_prefetch = 0 : i64, scratch_operands = 0 : i64, tpu.core_type = #tpu.core_type<tc>, window_params = [{transform_indices = @transform_0, window_bounds = array<i64: 1, 16, 8>}, {pipeline_mode = #tpu.pipeline_mode<synchronous>, transform_indices = @transform_1, window_bounds = array<i64: 2, 8, 16>}, {pipeline_mode = #tpu.pipeline_mode<synchronous>, transform_indices = @transform_2, window_bounds = array<i64: 2, 1, 16>}, {pipeline_mode = #tpu.pipeline_mode<synchronous>, transform_indices = @transform_3, window_bounds = array<i64: 2, 16, 8>}, {pipeline_mode = #tpu.pipeline_mode<synchronous>, transform_indices = @transform_4, window_bounds = array<i64: 1, 8>}, {pipeline_mode = #tpu.pipeline_mode<synchronous>, transform_indices = @transform_5, window_bounds = array<i64: 16, 16>}, {transform_indices = @transform_6, window_bounds = array<i64: 1, 1, 128>}]} {
    %c0 = arith.constant 0 : index
    %c0_0 = arith.constant 0 : index
    %c0_1 = arith.constant 0 : index
    %0 = vector.load %arg1[%c0, %c0_0, %c0_1] : memref<1x16x8xf32, #tpu.memory_space<vmem>>, vector<1x16x8xf32>
    %c0_2 = arith.constant 0 : index
    %c0_3 = arith.constant 0 : index
    %1 = vector.load %arg6[%c0_2, %c0_3] : memref<16x16xf32, #tpu.memory_space<vmem>>, vector<16x16xf32>
    %2 = vector.shape_cast %0 : vector<1x16x8xf32> to vector<16x8xf32>
    %cst = arith.constant 0.000000e+00 : f32
    %3 = vector.broadcast %cst : f32 to vector<16x8xf32>
    %c0_i32 = arith.constant 0 : i32
    %c2_i32 = arith.constant 2 : i32
    %4 = arith.addi %c0_i32, %c2_i32 : i32
    %c1_i32 = arith.constant 1 : i32
    %5 = scf.for %arg8 = %c0_i32 to %4 step %c1_i32 iter_args(%arg9 = %3) -> (vector<16x8xf32>)  : i32 {
      %40 = arith.index_cast %arg8 : i32 to index
      %c0_19 = arith.constant 0 : index
      %c0_20 = arith.constant 0 : index
      %41 = vector.load %arg2[%40, %c0_19, %c0_20] : memref<2x8x16xf32, #tpu.memory_space<vmem>>, vector<1x8x16xf32>
      %42 = vector.shape_cast %41 : vector<1x8x16xf32> to vector<8x16xf32>
      %cst_21 = arith.constant dense<0.000000e+00> : vector<16x16xf32>
      %43 = tpu.matmul %2, %42, %cst_21 {dimension_numbers = #tpu.dot_dimension_numbers<[1], [0], [0], [1], [0, 0, 1, 1], [], []>} : vector<16x8xf32>, vector<8x16xf32>, vector<16x16xf32> -> vector<16x16xf32>
      %44 = vector.shape_cast %43 : vector<16x16xf32> to vector<1x16x16xf32>
      %45 = arith.index_cast %arg8 : i32 to index
      %c0_22 = arith.constant 0 : index
      %c0_23 = arith.constant 0 : index
      %46 = vector.load %arg3[%45, %c0_22, %c0_23] : memref<2x1x16xf32, #tpu.memory_space<vmem>>, vector<1x1x16xf32>
      %47 = vector.shape_cast %46 : vector<1x1x16xf32> to vector<1x16xf32>
      "tpu.trace_start"() <{level = 10 : i32, message = "bnd,bmd->bnm"}> : () -> ()
      %cst_24 = arith.constant dense<0.000000e+00> : vector<1x16x16xf32>
      %48 = tpu.matmul %44, %44, %cst_24 {dimension_numbers = #tpu.dot_dimension_numbers<[2], [2], [1], [1], [0, 0, 0, 1, 1, 1], [0], [0]>} : vector<1x16x16xf32>, vector<1x16x16xf32>, vector<1x16x16xf32> -> vector<1x16x16xf32>
      "tpu.trace_stop"() : () -> ()
      %49 = vector.shape_cast %1 : vector<16x16xf32> to vector<1x16x16xf32>
      %50 = arith.mulf %48, %49 : vector<1x16x16xf32>
      %cst_25 = arith.constant 0.000000e+00 : f32
      %51 = vector.broadcast %cst_25 : f32 to vector<1x16x16xf32>
      %52 = arith.cmpf oeq, %50, %51 : vector<1x16x16xf32>
      %cst_26 = arith.constant -1.000000e+16 : f32
      %53 = vector.broadcast %cst_26 : f32 to vector<1x16x16xf32>
      %54 = arith.select %52, %53, %50 : vector<1x16x16xi1>, vector<1x16x16xf32>
      %cst_27 = arith.constant dense<0xFF800000> : vector<1x16xf32>
      %55 = vector.multi_reduction <maximumf>, %54, %cst_27 [2] : vector<1x16x16xf32> to vector<1x16xf32>
      %56 = vector.shape_cast %55 : vector<1x16xf32> to vector<1x16x1xf32>
      %57 = vector.broadcast %56 : vector<1x16x1xf32> to vector<1x16x16xf32>
      %58 = arith.subf %54, %57 : vector<1x16x16xf32>
      %59 = math.exp %58 : vector<1x16x16xf32>
      %cst_28 = arith.constant dense<0.000000e+00> : vector<1x16xf32>
      %60 = vector.multi_reduction <add>, %59, %cst_28 [2] : vector<1x16x16xf32> to vector<1x16xf32>
      %61 = vector.shape_cast %60 : vector<1x16xf32> to vector<1x16x1xf32>
      "tpu.trace_start"() <{level = 10 : i32, message = "bnm,bmd->bnd"}> : () -> ()
      %cst_29 = arith.constant dense<0.000000e+00> : vector<1x16x16xf32>
      %62 = tpu.matmul %59, %44, %cst_29 {dimension_numbers = #tpu.dot_dimension_numbers<[2], [1], [1], [2], [0, 0, 0, 1, 1, 2], [0], [0]>} : vector<1x16x16xf32>, vector<1x16x16xf32>, vector<1x16x16xf32> -> vector<1x16x16xf32>
      "tpu.trace_stop"() : () -> ()
      %63 = tpu.reciprocal %61 {approx = true} : vector<1x16x1xf32> -> vector<1x16x1xf32>
      %64 = arith.mulf %61, %63 : vector<1x16x1xf32>
      %cst_30 = arith.constant 2.000000e+00 : f32
      %65 = vector.broadcast %cst_30 : f32 to vector<1x16x1xf32>
      %66 = arith.subf %65, %64 : vector<1x16x1xf32>
      %67 = arith.mulf %63, %66 : vector<1x16x1xf32>
      %68 = vector.broadcast %67 : vector<1x16x1xf32> to vector<1x16x16xf32>
      %69 = arith.mulf %62, %68 : vector<1x16x16xf32>
      %70 = vector.shape_cast %47 : vector<1x16xf32> to vector<1x1x16xf32>
      %71 = vector.broadcast %70 : vector<1x1x16xf32> to vector<1x16x16xf32>
      %72 = arith.addf %69, %71 : vector<1x16x16xf32>
      %cst_31 = arith.constant 0.000000e+00 : f32
      %73 = vector.broadcast %cst_31 : f32 to vector<1x16x16xf32>
      %74 = arith.cmpf oge, %72, %73 : vector<1x16x16xf32>
      %cst_32 = arith.constant 0.00999999977 : f32
      %75 = vector.broadcast %cst_32 : f32 to vector<1x16x16xf32>
      %76 = arith.mulf %75, %72 : vector<1x16x16xf32>
      %77 = arith.select %74, %72, %76 : vector<1x16x16xi1>, vector<1x16x16xf32>
      %78 = vector.shape_cast %77 : vector<1x16x16xf32> to vector<16x16xf32>
      %79 = arith.index_cast %arg8 : i32 to index
      %c0_33 = arith.constant 0 : index
      %c0_34 = arith.constant 0 : index
      %80 = vector.load %arg4[%79, %c0_33, %c0_34] : memref<2x16x8xf32, #tpu.memory_space<vmem>>, vector<1x16x8xf32>
      %81 = vector.shape_cast %80 : vector<1x16x8xf32> to vector<16x8xf32>
      %cst_35 = arith.constant dense<0.000000e+00> : vector<16x8xf32>
      %82 = tpu.matmul %78, %81, %cst_35 {dimension_numbers = #tpu.dot_dimension_numbers<[1], [0], [0], [1], [0, 0, 1, 1], [], []>} : vector<16x16xf32>, vector<16x8xf32>, vector<16x8xf32> -> vector<16x8xf32>
      %83 = arith.addf %arg9, %82 : vector<16x8xf32>
      scf.yield %83 : vector<16x8xf32>
    }
    %c2_i32_4 = arith.constant 2 : i32
    %6 = vector.shape_cast %5 : vector<16x8xf32> to vector<1x16x8xf32>
    %c0_5 = arith.constant 0 : index
    %c0_6 = arith.constant 0 : index
    %7 = vector.load %arg5[%c0_5, %c0_6] : memref<1x8xf32, #tpu.memory_space<vmem>>, vector<1x8xf32>
    "tpu.trace_start"() <{level = 10 : i32, message = "bnd,bmd->bnm"}> : () -> ()
    %cst_7 = arith.constant dense<0.000000e+00> : vector<1x16x16xf32>
    %8 = tpu.matmul %6, %6, %cst_7 {dimension_numbers = #tpu.dot_dimension_numbers<[2], [2], [1], [1], [0, 0, 0, 1, 1, 1], [0], [0]>} : vector<1x16x8xf32>, vector<1x16x8xf32>, vector<1x16x16xf32> -> vector<1x16x16xf32>
    "tpu.trace_stop"() : () -> ()
    %9 = vector.shape_cast %1 : vector<16x16xf32> to vector<1x16x16xf32>
    %10 = arith.mulf %8, %9 : vector<1x16x16xf32>
    %cst_8 = arith.constant 0.000000e+00 : f32
    %11 = vector.broadcast %cst_8 : f32 to vector<1x16x16xf32>
    %12 = arith.cmpf oeq, %10, %11 : vector<1x16x16xf32>
    %cst_9 = arith.constant -1.000000e+16 : f32
    %13 = vector.broadcast %cst_9 : f32 to vector<1x16x16xf32>
    %14 = arith.select %12, %13, %10 : vector<1x16x16xi1>, vector<1x16x16xf32>
    %cst_10 = arith.constant dense<0xFF800000> : vector<1x16xf32>
    %15 = vector.multi_reduction <maximumf>, %14, %cst_10 [2] : vector<1x16x16xf32> to vector<1x16xf32>
    %16 = vector.shape_cast %15 : vector<1x16xf32> to vector<1x16x1xf32>
    %17 = vector.broadcast %16 : vector<1x16x1xf32> to vector<1x16x16xf32>
    %18 = arith.subf %14, %17 : vector<1x16x16xf32>
    %19 = math.exp %18 : vector<1x16x16xf32>
    %cst_11 = arith.constant dense<0.000000e+00> : vector<1x16xf32>
    %20 = vector.multi_reduction <add>, %19, %cst_11 [2] : vector<1x16x16xf32> to vector<1x16xf32>
    %21 = vector.shape_cast %20 : vector<1x16xf32> to vector<1x16x1xf32>
    "tpu.trace_start"() <{level = 10 : i32, message = "bnm,bmd->bnd"}> : () -> ()
    %cst_12 = arith.constant dense<0.000000e+00> : vector<1x16x8xf32>
    %22 = tpu.matmul %19, %6, %cst_12 {dimension_numbers = #tpu.dot_dimension_numbers<[2], [1], [1], [2], [0, 0, 0, 1, 1, 2], [0], [0]>} : vector<1x16x16xf32>, vector<1x16x8xf32>, vector<1x16x8xf32> -> vector<1x16x8xf32>
    "tpu.trace_stop"() : () -> ()
    %23 = tpu.reciprocal %21 {approx = true} : vector<1x16x1xf32> -> vector<1x16x1xf32>
    %24 = arith.mulf %21, %23 : vector<1x16x1xf32>
    %cst_13 = arith.constant 2.000000e+00 : f32
    %25 = vector.broadcast %cst_13 : f32 to vector<1x16x1xf32>
    %26 = arith.subf %25, %24 : vector<1x16x1xf32>
    %27 = arith.mulf %23, %26 : vector<1x16x1xf32>
    %28 = vector.broadcast %27 : vector<1x16x1xf32> to vector<1x16x8xf32>
    %29 = arith.mulf %22, %28 : vector<1x16x8xf32>
    %30 = vector.shape_cast %7 : vector<1x8xf32> to vector<1x1x8xf32>
    %31 = vector.broadcast %30 : vector<1x1x8xf32> to vector<1x16x8xf32>
    %32 = arith.addf %29, %31 : vector<1x16x8xf32>
    %cst_14 = arith.constant 0.000000e+00 : f32
    %33 = vector.broadcast %cst_14 : f32 to vector<1x16x8xf32>
    %34 = arith.cmpf oge, %32, %33 : vector<1x16x8xf32>
    %cst_15 = arith.constant 0.00999999977 : f32
    %35 = vector.broadcast %cst_15 : f32 to vector<1x16x8xf32>
    %36 = arith.mulf %35, %32 : vector<1x16x8xf32>
    %37 = arith.select %34, %32, %36 : vector<1x16x8xi1>, vector<1x16x8xf32>
    %38 = vector.shape_cast %37 : vector<1x16x8xf32> to vector<1x1x128xf32>
    %c0_16 = arith.constant 0 : index
    %c0_17 = arith.constant 0 : index
    %c0_18 = arith.constant 0 : index
    %39 = vector.load %arg7[%c0_16, %c0_17, %c0_18] : memref<1x1x128xf32, #tpu.memory_space<vmem>>, vector<1x1x128xf32>
    tpu.vector_store %arg7[%c0_16, %c0_17, %c0_18], %38 {strides = array<i32>} : memref<1x1x128xf32, #tpu.memory_space<vmem>>, vector<1x1x128xf32>,
    return
  }
  func.func @transform_0(%arg0: i32) -> (i32, i32, i32) {
    %c0_i32 = arith.constant 0 : i32
    %c0_i32_0 = arith.constant 0 : i32
    %c0_i32_1 = arith.constant 0 : i32
    return %arg0, %c0_i32, %c0_i32_0 : i32, i32, i32
  }
  func.func @transform_1(%arg0: i32) -> (i32, i32, i32) {
    %c0_i32 = arith.constant 0 : i32
    %c0_i32_0 = arith.constant 0 : i32
    %c0_i32_1 = arith.constant 0 : i32
    %c0_i32_2 = arith.constant 0 : i32
    return %c0_i32, %c0_i32_0, %c0_i32_1 : i32, i32, i32
  }
  func.func @transform_2(%arg0: i32) -> (i32, i32, i32) {
    %c0_i32 = arith.constant 0 : i32
    %c0_i32_0 = arith.constant 0 : i32
    %c0_i32_1 = arith.constant 0 : i32
    %c0_i32_2 = arith.constant 0 : i32
    return %c0_i32, %c0_i32_0, %c0_i32_1 : i32, i32, i32
  }
  func.func @transform_3(%arg0: i32) -> (i32, i32, i32) {
    %c0_i32 = arith.constant 0 : i32
    %c0_i32_0 = arith.constant 0 : i32
    %c0_i32_1 = arith.constant 0 : i32
    %c0_i32_2 = arith.constant 0 : i32
    return %c0_i32, %c0_i32_0, %c0_i32_1 : i32, i32, i32
  }
  func.func @transform_4(%arg0: i32) -> (i32, i32) {
    %c0_i32 = arith.constant 0 : i32
    %c0_i32_0 = arith.constant 0 : i32
    %c0_i32_1 = arith.constant 0 : i32
    return %c0_i32, %c0_i32_0 : i32, i32
  }
  func.func @transform_5(%arg0: i32) -> (i32, i32) {
    %c0_i32 = arith.constant 0 : i32
    %c0_i32_0 = arith.constant 0 : i32
    %c0_i32_1 = arith.constant 0 : i32
    return %c0_i32, %c0_i32_0 : i32, i32
  }
  func.func @transform_6(%arg0: i32) -> (i32, i32, i32) {
    %c0_i32 = arith.constant 0 : i32
    %c0_i32_0 = arith.constant 0 : i32
    %c0_i32_1 = arith.constant 0 : i32
    return %arg0, %c0_i32, %c0_i32_0 : i32, i32, i32
  }
}

</mosaic_0001>

<llo_original>
// kernel: tpu_custom_call.1
$region0: #{tpu_custom_call.1}
  #allocation0 [shape = 'u32[]', space=smem, size = 0x4, offset = 0x4, fixed_abs, tag = 'smem constant byte address 0x4 - core index']
  #allocation1 [shape = 'u32[144,128]{1,0:T(1,128)}', space=vmem, size = 0x12000, scoped, tag = 'internal scratch']
  %s0 = inlined_call_operand.vmem [shape: f32[2,16,8], index: 0, kind: input, shape index: {}]
  %s1 = inlined_call_operand.vmem [shape: f32[2,8,16], index: 1, kind: input, shape index: {}]
  %s2 = inlined_call_operand.vmem [shape: f32[2,1,16], index: 2, kind: input, shape index: {}]
  %s3 = inlined_call_operand.vmem [shape: f32[2,16,8], index: 3, kind: input, shape index: {}]
  %s4 = inlined_call_operand.vmem [shape: f32[1,8], index: 4, kind: input, shape index: {}]
  %s5 = inlined_call_operand.vmem [shape: f32[16,16], index: 5, kind: input, shape index: {}]
  %s6 = inlined_call_operand.hbm [shape: f32[2,1,128], index: 6, kind: output, shape index: {}]
  %s7 = sld [smem:[#allocation0]]
  $region64: #{tpu_custom_call.1} parent=0
    _
  %s9 = ssub.s32 1, %s7
  %s10 = scalar_select 0, %s9, %s7
  $region1: #{tpu_custom_call.1} parent=0
    #allocation2 [shape = 'u8[1024]{0}', space=vmem, size = 0x400, scoped, tag = 'output window, operand 0']
    #allocation3 [shape = 's32[2]{0}', space=sflag, size = 0x8, scoped, tag = 'scoped memory for tpu_custom_call.1']
    %11 = vsyncpa [#allocation3], 0
    %s12 = scalar_lea.sflag [#allocation3], 1
    %13 = vsyncpa %s12, 0
    loop: start=0, step=1, limit=4
    $region2: #{tpu_custom_call.1} parent=1 // loop_pre_header
      _
    $region3: #{tpu_custom_call.1} parent=1 // loop_header
      %s15 = sphi 0, %s19
      %p16 = scmp.ge.s32.totalorder %s15, 4
      %s25 = sphi 0, %s27
      %s28 = sphi 0, %s25
      %s29 = sphi 0, %s28
      %s45 = sphi 0, %s29
      %s49 = sphi 0, %s49
      %s51 = sphi 0, %s49
      %s52 = sphi 0, %s51
      %s66 = sphi 0, %s52
      %s70 = sphi 0, %s70
      %s72 = sphi 0, %s70
      %s73 = sphi 0, %s72
      %s87 = sphi 0, %s73
      %s91 = sphi 0, %s91
      %s93 = sphi 0, %s91
      %s94 = sphi 0, %s93
      %s108 = sphi 0, %s94
      %s112 = sphi 0, %s112
      %s114 = sphi 0, %s112
      %s115 = sphi 0, %s114
      %s129 = sphi 0, %s115
      %s133 = sphi 0, %s133
      %s135 = sphi 0, %s133
      %s136 = sphi 0, %s135
      %s150 = sphi 0, %s136
      %s156 = sphi 0, %s158
      %s159 = sphi 0, %s156
      %s160 = sphi 0, %s159
      %s176 = sphi 0, %s160
    $region4: #{tpu_custom_call.1} parent=1 // loop_header_branch
      %18 = sbr.rel (%p16) target = $region8
    $region5: #{tpu_custom_call.1} parent=1 // loop_body
      %s20 = ssub.s32 %s15, 1
      %s21 = ssub.s32 %s15, 2
      %s22 = sadd.s32 %s15, 1
      %s23 = ssub.s32 %s15, %s22
      %p24 = scmp.eq.s32.totalorder %s23, 0
      %s26 = sadd.s32 %s25, 1
      %s27 = scalar_select %p24, %s25, %s26
      %p30 = pneg %p24
      %p31 = scmp.eq.s32.totalorder %s15, 1
      %p32 = por %p30, %p31
      %p33 = scmp.ne.s32.totalorder %s25, %s28
      %p34 = scmp.eq.s32.totalorder %s15, 0
      %p35 = por %p33, %p34
      %p36 = scmp.ne.s32.totalorder %s25, %s28
      %p37 = scmp.eq.s32.totalorder %s20, 1
      %p38 = por %p36, %p37
      %p39 = scmp.ne.s32.totalorder %s28, %s29
      %p40 = scmp.eq.s32.totalorder %s20, 0
      %p41 = por %p39, %p40
      %p42 = scmp.ne.s32.totalorder %s28, %s29
      %p43 = scmp.eq.s32.totalorder %s21, 1
      %p44 = por %p42, %p43
      %p46 = scmp.ne.s32.totalorder %s29, %s45
      %p47 = scmp.eq.s32.totalorder %s21, 0
      %p48 = por %p46, %p47
      %s50 = sadd.s32 %s49, 1
      %p53 = scmp.eq.s32.totalorder %s15, 1
      %p54 = scmp.ne.s32.totalorder %s49, %s51
      %p55 = scmp.eq.s32.totalorder %s15, 0
      %p56 = por %p54, %p55
      %p57 = scmp.ne.s32.totalorder %s49, %s51
      %p58 = scmp.eq.s32.totalorder %s20, 1
      %p59 = por %p57, %p58
      %p60 = scmp.ne.s32.totalorder %s51, %s52
      %p61 = scmp.eq.s32.totalorder %s20, 0
      %p62 = por %p60, %p61
      %p63 = scmp.ne.s32.totalorder %s51, %s52
      %p64 = scmp.eq.s32.totalorder %s21, 1
      %p65 = por %p63, %p64
      %p67 = scmp.ne.s32.totalorder %s52, %s66
      %p68 = scmp.eq.s32.totalorder %s21, 0
      %p69 = por %p67, %p68
      %s71 = sadd.s32 %s70, 1
      %p74 = scmp.eq.s32.totalorder %s15, 1
      %p75 = scmp.ne.s32.totalorder %s70, %s72
      %p76 = scmp.eq.s32.totalorder %s15, 0
      %p77 = por %p75, %p76
      %p78 = scmp.ne.s32.totalorder %s70, %s72
      %p79 = scmp.eq.s32.totalorder %s20, 1
      %p80 = por %p78, %p79
      %p81 = scmp.ne.s32.totalorder %s72, %s73
      %p82 = scmp.eq.s32.totalorder %s20, 0
      %p83 = por %p81, %p82
      %p84 = scmp.ne.s32.totalorder %s72, %s73
      %p85 = scmp.eq.s32.totalorder %s21, 1
      %p86 = por %p84, %p85
      %p88 = scmp.ne.s32.totalorder %s73, %s87
      %p89 = scmp.eq.s32.totalorder %s21, 0
      %p90 = por %p88, %p89
      %s92 = sadd.s32 %s91, 1
      %p95 = scmp.eq.s32.totalorder %s15, 1
      %p96 = scmp.ne.s32.totalorder %s91, %s93
      %p97 = scmp.eq.s32.totalorder %s15, 0
      %p98 = por %p96, %p97
      %p99 = scmp.ne.s32.totalorder %s91, %s93
      %p100 = scmp.eq.s32.totalorder %s20, 1
      %p101 = por %p99, %p100
      %p102 = scmp.ne.s32.totalorder %s93, %s94
      %p103 = scmp.eq.s32.totalorder %s20, 0
      %p104 = por %p102, %p103
      %p105 = scmp.ne.s32.totalorder %s93, %s94
      %p106 = scmp.eq.s32.totalorder %s21, 1
      %p107 = por %p105, %p106
      %p109 = scmp.ne.s32.totalorder %s94, %s108
      %p110 = scmp.eq.s32.totalorder %s21, 0
      %p111 = por %p109, %p110
      %s113 = sadd.s32 %s112, 1
      %p116 = scmp.eq.s32.totalorder %s15, 1
      %p117 = scmp.ne.s32.totalorder %s112, %s114
      %p118 = scmp.eq.s32.totalorder %s15, 0
      %p119 = por %p117, %p118
      %p120 = scmp.ne.s32.totalorder %s112, %s114
      %p121 = scmp.eq.s32.totalorder %s20, 1
      %p122 = por %p120, %p121
      %p123 = scmp.ne.s32.totalorder %s114, %s115
      %p124 = scmp.eq.s32.totalorder %s20, 0
      %p125 = por %p123, %p124
      %p126 = scmp.ne.s32.totalorder %s114, %s115
      %p127 = scmp.eq.s32.totalorder %s21, 1
      %p128 = por %p126, %p127
      %p130 = scmp.ne.s32.totalorder %s115, %s129
      %p131 = scmp.eq.s32.totalorder %s21, 0
      %p132 = por %p130, %p131
      %s134 = sadd.s32 %s133, 1
      %p137 = scmp.eq.s32.totalorder %s15, 1
      %p138 = scmp.ne.s32.totalorder %s133, %s135
      %p139 = scmp.eq.s32.totalorder %s15, 0
      %p140 = por %p138, %p139
      %p141 = scmp.ne.s32.totalorder %s133, %s135
      %p142 = scmp.eq.s32.totalorder %s20, 1
      %p143 = por %p141, %p142
      %p144 = scmp.ne.s32.totalorder %s135, %s136
      %p145 = scmp.eq.s32.totalorder %s20, 0
      %p146 = por %p144, %p145
      %p147 = scmp.ne.s32.totalorder %s135, %s136
      %p148 = scmp.eq.s32.totalorder %s21, 1
      %p149 = por %p147, %p148
      %p151 = scmp.ne.s32.totalorder %s136, %s150
      %p152 = scmp.eq.s32.totalorder %s21, 0
      %p153 = por %p151, %p152
      %s154 = ssub.s32 %s15, %s22
      %p155 = scmp.eq.s32.totalorder %s154, 0
      %s157 = sadd.s32 %s156, 1
      %s158 = scalar_select %p155, %s156, %s157
      %p161 = pneg %p155
      %p162 = scmp.eq.s32.totalorder %s15, 1
      %p163 = por %p161, %p162
      %p164 = scmp.ne.s32.totalorder %s156, %s159
      %p165 = scmp.eq.s32.totalorder %s15, 0
      %p166 = por %p164, %p165
      %p167 = scmp.ne.s32.totalorder %s156, %s159
      %p168 = scmp.eq.s32.totalorder %s20, 1
      %p169 = por %p167, %p168
      %p170 = scmp.ne.s32.totalorder %s159, %s160
      %p171 = scmp.eq.s32.totalorder %s20, 0
      %p172 = por %p170, %p171
      %p173 = scmp.ne.s32.totalorder %s159, %s160
      %p174 = scmp.eq.s32.totalorder %s21, 1
      %p175 = por %p173, %p174
      %p177 = scmp.ne.s32.totalorder %s160, %s176
      %p178 = scmp.eq.s32.totalorder %s21, 0
      %p179 = por %p177, %p178
      %p180 = scmp.le.s32.totalorder 1, %s15
      %p181 = scmp.lt.s32.totalorder %s15, 3
      %p182 = pnand %p180, %p181
      %p183 = pneg %p182
      // Predicated region
      $region9: #{tpu_custom_call.1} parent=5 // pred_check
        _
      $region10: #{tpu_custom_call.1} parent=5 // pred_check_branch
        %185 = sbr.rel (%p182) target = $region12
      $region11: #{tpu_custom_call.1} parent=5 // pred_region
        %s186 = ssub.s32 %s15, 1
        // Predicated region
        $region13: #{tpu_custom_call.1} parent=11 // pred_check
          %p187 = pneg %p62
        $region14: #{tpu_custom_call.1} parent=11 // pred_check_branch
          %189 = sbr.rel (%p187) target = $region16
        $region15: #{tpu_custom_call.1} parent=11 // pred_region
          _
        $region16: #{tpu_custom_call.1} parent=11 // pred_fallthru
          _
        // Predicated region
        $region17: #{tpu_custom_call.1} parent=11 // pred_check
          %p190 = pneg %p83
        $region18: #{tpu_custom_call.1} parent=11 // pred_check_branch
          %192 = sbr.rel (%p190) target = $region20
        $region19: #{tpu_custom_call.1} parent=11 // pred_region
          _
        $region20: #{tpu_custom_call.1} parent=11 // pred_fallthru
          _
        // Predicated region
        $region21: #{tpu_custom_call.1} parent=11 // pred_check
          %p193 = pneg %p104
        $region22: #{tpu_custom_call.1} parent=11 // pred_check_branch
          %195 = sbr.rel (%p193) target = $region24
        $region23: #{tpu_custom_call.1} parent=11 // pred_region
          _
        $region24: #{tpu_custom_call.1} parent=11 // pred_fallthru
          _
        // Predicated region
        $region25: #{tpu_custom_call.1} parent=11 // pred_check
          %p196 = pneg %p125
        $region26: #{tpu_custom_call.1} parent=11 // pred_check_branch
          %198 = sbr.rel (%p196) target = $region28
        $region27: #{tpu_custom_call.1} parent=11 // pred_region
          _
        $region28: #{tpu_custom_call.1} parent=11 // pred_fallthru
          _
        // Predicated region
        $region29: #{tpu_custom_call.1} parent=11 // pred_check
          %p199 = pneg %p146
        $region30: #{tpu_custom_call.1} parent=11 // pred_check_branch
          %201 = sbr.rel (%p199) target = $region32
        $region31: #{tpu_custom_call.1} parent=11 // pred_region
          _
        $region32: #{tpu_custom_call.1} parent=11 // pred_fallthru
          _
      $region12: #{tpu_custom_call.1} parent=5 // pred_fallthru
        _
      %p202 = scmp.lt.s32.totalorder %s15, 2
      // Predicated region
      $region33: #{tpu_custom_call.1} parent=5 // pred_check
        %p203 = pneg %p202
      $region34: #{tpu_custom_call.1} parent=5 // pred_check_branch
        %205 = sbr.rel (%p203) target = $region36
      $region35: #{tpu_custom_call.1} parent=5 // pred_region
        // Predicated region
        $region37: #{tpu_custom_call.1} parent=35 // pred_check
          %p206 = pneg %p35
        $region38: #{tpu_custom_call.1} parent=35 // pred_check_branch
          %208 = sbr.rel (%p206) target = $region40
        $region39: #{tpu_custom_call.1} parent=35 // pred_region
          %p209 = scmp.lt.s32.totalorder %s15, 1
          %s210 = scalar_select %p209, %s15, 1
          %s211 = smul.addr %s210, 2
          %s212 = smul.addr %s211, 8
          %s213 = scalar_lea.vmem %s0, %s212
        $region40: #{tpu_custom_call.1} parent=35 // pred_fallthru
          _
      $region36: #{tpu_custom_call.1} parent=5 // pred_fallthru
        _
      %p214 = scmp.le.s32.totalorder 1, %s15
      %p215 = scmp.lt.s32.totalorder %s15, 3
      %p216 = pnand %p214, %p215
      %p217 = pneg %p216
      // Predicated region
      $region41: #{tpu_custom_call.1} parent=5 // pred_check
        _
      $region42: #{tpu_custom_call.1} parent=5 // pred_check_branch
        %219 = sbr.rel (%p216) target = $region44
      $region43: #{tpu_custom_call.1} parent=5 // pred_region
        %s220 = ssub.s32 %s15, 1
        %p221 = scmp.lt.s32.totalorder %s20, 1
        %s222 = scalar_select %p221, %s20, 1
        %s223 = smul.addr %s222, 2
        %s224 = smul.addr %s223, 8
        %s225 = scalar_lea.vmem %s0, %s224
        %p226 = pneg %p41
        %p227 = pneg %p38
        %p228 = pneg %p62
        %p229 = pneg %p59
        %p230 = pneg %p83
        %p231 = pneg %p80
        %p232 = pneg %p104
        %p233 = pneg %p101
        %p234 = pneg %p125
        %p235 = pneg %p122
        %p236 = pneg %p146
        %p237 = pneg %p143
        %p238 = pneg %p172
        %p239 = pneg %p169
        %s240 = sand.u32 %s159, 1
        %s241 = scalar_lea.sflag [#allocation3], %s240
        %s242 = sand.u32 %s159, 1
        %s243 = scalar_lea.vmem [#allocation2], %s242
        %p244 = scmp.lt.s32.totalorder %s20, 1
        %s245 = scalar_select %p244, %s20, 1
        %s246 = smul.addr %s245, 2
        %s247 = smul.addr %s246, 8
        %s248 = scalar_lea.vmem %s0, %s247
        %v249 = vld [vmem:[%s248] sm:$0xff]
        %v250 = vld [vmem:[%s248 + $0x8] sm:$0xff]
        %v251 = vld [vmem:[%s5] sm:$0xff]
        %v252 = vld [vmem:[%s5 + $0x8] sm:$0xff]
        loop: start=0, step=1, limit=2
        $region45: #{tpu_custom_call.1} parent=43 // loop_pre_header
          _
        $region46: #{tpu_custom_call.1} parent=43 // loop_header
          %s254 = sphi 0, %s258
          %p255 = scmp.ge.s32.totalorder %s254, 2
          %v259 = vphi 0.0, %v644
          %v260 = vphi 0.0, %v645
        $region47: #{tpu_custom_call.1} parent=43 // loop_header_branch
          %257 = sbr.rel (%p255) target = $region51
        $region48: #{tpu_custom_call.1} parent=43 // loop_body
          %s261 = smul.u32 %s254, 8
          %s262 = scalar_lea.vmem %s1, %s261
          %v263 = vld [vmem:[%s262] sm:$0xff]
          %vm264 = vcmask 64512
          %v266 = vsel %vm264, %v249, 0
          %v269 = vsel %vm264, %v250, 0
          %271 = vmatprep.subr.mxu0 0.0
          %272 = vmatpush1.msra.mxu0 %v263
          %273 = vmatprep.subr.mxu0 0.0
          %274 = vmatpush1.msra.mxu0 0.0
          %275 = vmatprep.subr.mxu0 0.0
          %276 = vmatpush1.msra.mxu0 0.0
          %277 = vmatprep.subr.mxu0 0.0
          %278 = vmatpush1.msra.mxu0 0.0
          %279 = vmatprep.subr.mxu0 0.0
          %280 = vmatpush1.msra.mxu0 0.0
          %281 = vmatprep.subr.mxu0 0.0
          %282 = vmatpush1.msra.mxu0 0.0
          %283 = vmatprep.subr.mxu0 0.0
          %284 = vmatpush1.msra.mxu0 0.0
          %285 = vmatprep.subr.mxu0 0.0
          %286 = vmatpush1.msra.mxu0 0.0
          %287 = vmatprep.subr.mxu0 0.0
          %288 = vmatpush1.msra.mxu0 0.0
          %289 = vmatprep.subr.mxu0 0.0
          %290 = vmatpush1.msra.mxu0 0.0
          %291 = vmatprep.subr.mxu0 0.0
          %292 = vmatpush1.msra.mxu0 0.0
          %293 = vmatprep.subr.mxu0 0.0
          %294 = vmatpush1.msra.mxu0 0.0
          %295 = vmatprep.subr.mxu0 0.0
          %296 = vmatpush1.msra.mxu0 0.0
          %297 = vmatprep.subr.mxu0 0.0
          %298 = vmatpush1.msra.mxu0 0.0
          %299 = vmatprep.subr.mxu0 0.0
          %300 = vmatpush1.msra.mxu0 0.0
          %301 = vmatprep.subr.mxu0 0.0
          %302 = vmatpush1.msra.mxu0 0.0
          %303 = vmatprep.subr.mxu0 0.0
          %304 = vmatpush1.msra.mxu0 0.0
          %305 = vmatprep.subr.mxu0 0.0
          %306 = vmatpush1.msra.mxu0 0.0
          %307 = vmatprep.subr.mxu0 0.0
          %308 = vmatpush1.msra.mxu0 0.0
          %309 = vmatprep.subr.mxu0 0.0
          %310 = vmatpush1.msra.mxu0 0.0
          %311 = vmatprep.subr.mxu0 0.0
          %312 = vmatpush1.msra.mxu0 0.0
          %313 = vmatprep.subr.mxu0 0.0
          %314 = vmatpush1.msra.mxu0 0.0
          %315 = vmatprep.subr.mxu0 0.0
          %316 = vmatpush1.msra.mxu0 0.0
          %317 = vmatprep.subr.mxu0 0.0
          %318 = vmatpush1.msra.mxu0 0.0
          %319 = vmatprep.subr.mxu0 0.0
          %320 = vmatpush1.msra.mxu0 0.0
          %321 = vmatprep.subr.mxu0 0.0
          %322 = vmatpush1.msra.mxu0 0.0
          %323 = vmatprep.subr.mxu0 0.0
          %324 = vmatpush1.msra.mxu0 0.0
          %325 = vmatprep.subr.mxu0 0.0
          %326 = vmatpush1.msra.mxu0 0.0
          %327 = vmatprep.subr.mxu0 0.0
          %328 = vmatpush1.msra.mxu0 0.0
          %329 = vmatprep.subr.mxu0 0.0
          %330 = vmatpush1.msra.mxu0 0.0
          %331 = vmatprep.subr.mxu0 0.0
          %332 = vmatpush1.msra.mxu0 0.0
          %333 = vmatprep.subr.mxu0 0.0
          %334 = vmatpush1.msra.mxu0 0.0
          %335 = vmatprep.mubr.f32.mxu0 0.0
          %336 = vmatmul.mubr.f32.gmra.mrb[0].mxu0 %v266
          %v337 = vpop.f32.mrb[0].mxu0
          %v338 = vadd.f32 0.0, %v337
          %v339 = vpop.f32.mrb[0].mxu0
          %340 = vmatprep.mubr.f32.mxu0 0.0
          %341 = vmatmul.mubr.f32.gmra.mrb[0].mxu0 %v269
          %v342 = vpop.f32.mrb[0].mxu0
          %v343 = vadd.f32 0.0, %v342
          %v344 = vpop.f32.mrb[0].mxu0
          %345 = vdwg.mxu0
          %s346 = scalar_lea.vmem %s2, %s254
          %v347 = vld [vmem:[%s346] sm:$0x1]
          %vm348 = vcmask 130048
          %v350 = vsel %vm348, %v338, 0
          %v353 = vsel %vm348, %v343, 0
          %355 = vmatprep.subr.mxu0 0.0
          %356 = vmatpush1.xpose.msra.mxu0 %v350
          %357 = vmatprep.subr.mxu0 0.0
          %358 = vmatpush1.xpose.msra.mxu0 %v353
          %359 = vmatprep.subr.mxu0 0.0
          %360 = vmatpush1.xpose.msra.mxu0 0.0
          %361 = vmatprep.subr.mxu0 0.0
          %362 = vmatpush1.xpose.msra.mxu0 0.0
          %363 = vmatprep.subr.mxu0 0.0
          %364 = vmatpush1.xpose.msra.mxu0 0.0
          %365 = vmatprep.subr.mxu0 0.0
          %366 = vmatpush1.xpose.msra.mxu0 0.0
          %367 = vmatprep.subr.mxu0 0.0
          %368 = vmatpush1.xpose.msra.mxu0 0.0
          %369 = vmatprep.subr.mxu0 0.0
          %370 = vmatpush1.xpose.msra.mxu0 0.0
          %371 = vmatprep.subr.mxu0 0.0
          %372 = vmatpush1.xpose.msra.mxu0 0.0
          %373 = vmatprep.subr.mxu0 0.0
          %374 = vmatpush1.xpose.msra.mxu0 0.0
          %375 = vmatprep.subr.mxu0 0.0
          %376 = vmatpush1.xpose.msra.mxu0 0.0
          %377 = vmatprep.subr.mxu0 0.0
          %378 = vmatpush1.xpose.msra.mxu0 0.0
          %379 = vmatprep.subr.mxu0 0.0
          %380 = vmatpush1.xpose.msra.mxu0 0.0
          %381 = vmatprep.subr.mxu0 0.0
          %382 = vmatpush1.xpose.msra.mxu0 0.0
          %383 = vmatprep.subr.mxu0 0.0
          %384 = vmatpush1.xpose.msra.mxu0 0.0
          %385 = vmatprep.subr.mxu0 0.0
          %386 = vmatpush1.xpose.msra.mxu0 0.0
          %387 = vmatprep.subr.mxu0 0.0
          %388 = vmatpush1.xpose.msra.mxu0 0.0
          %389 = vmatprep.subr.mxu0 0.0
          %390 = vmatpush1.xpose.msra.mxu0 0.0
          %391 = vmatprep.subr.mxu0 0.0
          %392 = vmatpush1.xpose.msra.mxu0 0.0
          %393 = vmatprep.subr.mxu0 0.0
          %394 = vmatpush1.xpose.msra.mxu0 0.0
          %395 = vmatprep.subr.mxu0 0.0
          %396 = vmatpush1.xpose.msra.mxu0 0.0
          %397 = vmatprep.subr.mxu0 0.0
          %398 = vmatpush1.xpose.msra.mxu0 0.0
          %399 = vmatprep.subr.mxu0 0.0
          %400 = vmatpush1.xpose.msra.mxu0 0.0
          %401 = vmatprep.subr.mxu0 0.0
          %402 = vmatpush1.xpose.msra.mxu0 0.0
          %403 = vmatprep.subr.mxu0 0.0
          %404 = vmatpush1.xpose.msra.mxu0 0.0
          %405 = vmatprep.subr.mxu0 0.0
          %406 = vmatpush1.xpose.msra.mxu0 0.0
          %407 = vmatprep.subr.mxu0 0.0
          %408 = vmatpush1.xpose.msra.mxu0 0.0
          %409 = vmatprep.subr.mxu0 0.0
          %410 = vmatpush1.xpose.msra.mxu0 0.0
          %411 = vmatprep.subr.mxu0 0.0
          %412 = vmatpush1.xpose.msra.mxu0 0.0
          %413 = vmatprep.subr.mxu0 0.0
          %414 = vmatpush1.xpose.msra.mxu0 0.0
          %415 = vmatprep.subr.mxu0 0.0
          %416 = vmatpush1.xpose.msra.mxu0 0.0
          %417 = vmatprep.subr.mxu0 0.0
          %418 = vmatpush1.xpose.msra.mxu0 0.0
          %419 = vmatprep.mubr.f32.mxu0 0.0
          %420 = vmatmul.mubr.f32.gmra.mrb[0].mxu0 %v350
          %v421 = vpop.f32.mrb[0].mxu0
          %v422 = vadd.f32 0.0, %v421
          %v423 = vpop.f32.mrb[0].mxu0
          %424 = vmatprep.mubr.f32.mxu0 0.0
          %425 = vmatmul.mubr.f32.gmra.mrb[0].mxu0 %v353
          %v426 = vpop.f32.mrb[0].mxu0
          %v427 = vadd.f32 0.0, %v426
          %v428 = vpop.f32.mrb[0].mxu0
          %429 = vdwg.mxu0
          %v430 = vmul.f32 %v422, %v251
          %v431 = vmul.f32 %v427, %v252
          %vm432 = vcmp.eq.f32.partialorder %v430, 0.0
          %vm433 = vcmp.eq.f32.partialorder %v431, 0.0
          %v434 = vsel %vm432, -1e+16, %v430
          %v435 = vsel %vm433, -1e+16, %v431
          %v436 = vsel %vm348, %v434, -inf
          %437 = vmax.xlane.f32.xlu0 %v436
          %v438 = vpop.xlane.xlu0 %437
          %v439 = vsel %vm348, %v435, -inf
          %440 = vmax.xlane.f32.xlu0 %v439
          %v441 = vpop.xlane.xlu0 %440
          %v442 = vsub.f32 %v434, %v438
          %v443 = vsub.f32 %v435, %v441
          %v444 = vmul.f32 %v442, 1.442695
          %v445 = vpow.pop %v444
          %v446 = vmul.f32 %v443, 1.442695
          %v447 = vpow.pop %v446
          %v448 = vsel %vm348, %v445, 0.0
          %449 = vadd.xlane.f32.xlu0 %v448
          %v450 = vpop.xlane.xlu0 %449
          %v451 = vsel %vm348, %v447, 0.0
          %452 = vadd.xlane.f32.xlu0 %v451
          %v453 = vpop.xlane.xlu0 %452
          %v455 = vsel %vm348, %v445, 0
          %v458 = vsel %vm348, %v447, 0
          %460 = vmatprep.subr.mxu0 0.0
          %461 = vmatpush1.msra.mxu0 %v338
          %462 = vmatprep.subr.mxu0 0.0
          %463 = vmatpush1.msra.mxu0 %v343
          %464 = vmatprep.subr.mxu0 0.0
          %465 = vmatpush1.msra.mxu0 0.0
          %466 = vmatprep.subr.mxu0 0.0
          %467 = vmatpush1.msra.mxu0 0.0
          %468 = vmatprep.subr.mxu0 0.0
          %469 = vmatpush1.msra.mxu0 0.0
          %470 = vmatprep.subr.mxu0 0.0
          %471 = vmatpush1.msra.mxu0 0.0
          %472 = vmatprep.subr.mxu0 0.0
          %473 = vmatpush1.msra.mxu0 0.0
          %474 = vmatprep.subr.mxu0 0.0
          %475 = vmatpush1.msra.mxu0 0.0
          %476 = vmatprep.subr.mxu0 0.0
          %477 = vmatpush1.msra.mxu0 0.0
          %478 = vmatprep.subr.mxu0 0.0
          %479 = vmatpush1.msra.mxu0 0.0
          %480 = vmatprep.subr.mxu0 0.0
          %481 = vmatpush1.msra.mxu0 0.0
          %482 = vmatprep.subr.mxu0 0.0
          %483 = vmatpush1.msra.mxu0 0.0
          %484 = vmatprep.subr.mxu0 0.0
          %485 = vmatpush1.msra.mxu0 0.0
          %486 = vmatprep.subr.mxu0 0.0
          %487 = vmatpush1.msra.mxu0 0.0
          %488 = vmatprep.subr.mxu0 0.0
          %489 = vmatpush1.msra.mxu0 0.0
          %490 = vmatprep.subr.mxu0 0.0
          %491 = vmatpush1.msra.mxu0 0.0
          %492 = vmatprep.subr.mxu0 0.0
          %493 = vmatpush1.msra.mxu0 0.0
          %494 = vmatprep.subr.mxu0 0.0
          %495 = vmatpush1.msra.mxu0 0.0
          %496 = vmatprep.subr.mxu0 0.0
          %497 = vmatpush1.msra.mxu0 0.0
          %498 = vmatprep.subr.mxu0 0.0
          %499 = vmatpush1.msra.mxu0 0.0
          %500 = vmatprep.subr.mxu0 0.0
          %501 = vmatpush1.msra.mxu0 0.0
          %502 = vmatprep.subr.mxu0 0.0
          %503 = vmatpush1.msra.mxu0 0.0
          %504 = vmatprep.subr.mxu0 0.0
          %505 = vmatpush1.msra.mxu0 0.0
          %506 = vmatprep.subr.mxu0 0.0
          %507 = vmatpush1.msra.mxu0 0.0
          %508 = vmatprep.subr.mxu0 0.0
          %509 = vmatpush1.msra.mxu0 0.0
          %510 = vmatprep.subr.mxu0 0.0
          %511 = vmatpush1.msra.mxu0 0.0
          %512 = vmatprep.subr.mxu0 0.0
          %513 = vmatpush1.msra.mxu0 0.0
          %514 = vmatprep.subr.mxu0 0.0
          %515 = vmatpush1.msra.mxu0 0.0
          %516 = vmatprep.subr.mxu0 0.0
          %517 = vmatpush1.msra.mxu0 0.0
          %518 = vmatprep.subr.mxu0 0.0
          %519 = vmatpush1.msra.mxu0 0.0
          %520 = vmatprep.subr.mxu0 0.0
          %521 = vmatpush1.msra.mxu0 0.0
          %522 = vmatprep.subr.mxu0 0.0
          %523 = vmatpush1.msra.mxu0 0.0
          %524 = vmatprep.mubr.f32.mxu0 0.0
          %525 = vmatmul.mubr.f32.gmra.mrb[0].mxu0 %v455
          %v526 = vpop.f32.mrb[0].mxu0
          %v527 = vadd.f32 0.0, %v526
          %v528 = vpop.f32.mrb[0].mxu0
          %529 = vmatprep.mubr.f32.mxu0 0.0
          %530 = vmatmul.mubr.f32.gmra.mrb[0].mxu0 %v458
          %v531 = vpop.f32.mrb[0].mxu0
          %v532 = vadd.f32 0.0, %v531
          %v533 = vpop.f32.mrb[0].mxu0
          %534 = vdwg.mxu0
          %v535 = vrcp.pop %v450
          %v536 = vrcp.pop %v453
          %v537 = vmul.f32 %v450, %v535
          %v538 = vmul.f32 %v453, %v536
          %v539 = vsub.f32 2.0, %v537
          %v540 = vsub.f32 2.0, %v538
          %v541 = vmul.f32 %v535, %v539
          %v542 = vmul.f32 %v536, %v540
          %v543 = vmul.f32 %v527, %v541
          %v544 = vmul.f32 %v532, %v542
          %v546 = vlaneseq
          %v547 = vshrl.u32 %v546, 7
          %v548 = vsub.s32 0, %v547
          %v549 = vrot.slane %v347, %v548
          %v551 = vadd.f32 %v543, %v549
          %v552 = vadd.f32 %v544, %v549
          %vm553 = vcmp.ge.f32.partialorder %v551, 0.0
          %vm554 = vcmp.ge.f32.partialorder %v552, 0.0
          %v555 = vmul.f32 %v551, 0.01
          %v556 = vmul.f32 %v552, 0.01
          %v557 = vsel %vm553, %v551, %v555
          %v558 = vsel %vm554, %v552, %v556
          %s559 = smul.u32 %s254, 16
          %s560 = scalar_lea.vmem %s3, %s559
          %v561 = vld [vmem:[%s560] sm:$0xff]
          %v562 = vld [vmem:[%s560 + $0x8] sm:$0xff]
          %v564 = vsel %vm348, %v557, 0
          %v567 = vsel %vm348, %v558, 0
          %569 = vmatprep.subr.mxu0 0.0
          %570 = vmatpush1.msra.mxu0 %v561
          %571 = vmatprep.subr.mxu0 0.0
          %572 = vmatpush1.msra.mxu0 %v562
          %573 = vmatprep.subr.mxu0 0.0
          %574 = vmatpush1.msra.mxu0 0.0
          %575 = vmatprep.subr.mxu0 0.0
          %576 = vmatpush1.msra.mxu0 0.0
          %577 = vmatprep.subr.mxu0 0.0
          %578 = vmatpush1.msra.mxu0 0.0
          %579 = vmatprep.subr.mxu0 0.0
          %580 = vmatpush1.msra.mxu0 0.0
          %581 = vmatprep.subr.mxu0 0.0
          %582 = vmatpush1.msra.mxu0 0.0
          %583 = vmatprep.subr.mxu0 0.0
          %584 = vmatpush1.msra.mxu0 0.0
          %585 = vmatprep.subr.mxu0 0.0
          %586 = vmatpush1.msra.mxu0 0.0
          %587 = vmatprep.subr.mxu0 0.0
          %588 = vmatpush1.msra.mxu0 0.0
          %589 = vmatprep.subr.mxu0 0.0
          %590 = vmatpush1.msra.mxu0 0.0
          %591 = vmatprep.subr.mxu0 0.0
          %592 = vmatpush1.msra.mxu0 0.0
          %593 = vmatprep.subr.mxu0 0.0
          %594 = vmatpush1.msra.mxu0 0.0
          %595 = vmatprep.subr.mxu0 0.0
          %596 = vmatpush1.msra.mxu0 0.0
          %597 = vmatprep.subr.mxu0 0.0
          %598 = vmatpush1.msra.mxu0 0.0
          %599 = vmatprep.subr.mxu0 0.0
          %600 = vmatpush1.msra.mxu0 0.0
          %601 = vmatprep.subr.mxu0 0.0
          %602 = vmatpush1.msra.mxu0 0.0
          %603 = vmatprep.subr.mxu0 0.0
          %604 = vmatpush1.msra.mxu0 0.0
          %605 = vmatprep.subr.mxu0 0.0
          %606 = vmatpush1.msra.mxu0 0.0
          %607 = vmatprep.subr.mxu0 0.0
          %608 = vmatpush1.msra.mxu0 0.0
          %609 = vmatprep.subr.mxu0 0.0
          %610 = vmatpush1.msra.mxu0 0.0
          %611 = vmatprep.subr.mxu0 0.0
          %612 = vmatpush1.msra.mxu0 0.0
          %613 = vmatprep.subr.mxu0 0.0
          %614 = vmatpush1.msra.mxu0 0.0
          %615 = vmatprep.subr.mxu0 0.0
          %616 = vmatpush1.msra.mxu0 0.0
          %617 = vmatprep.subr.mxu0 0.0
          %618 = vmatpush1.msra.mxu0 0.0
          %619 = vmatprep.subr.mxu0 0.0
          %620 = vmatpush1.msra.mxu0 0.0
          %621 = vmatprep.subr.mxu0 0.0
          %622 = vmatpush1.msra.mxu0 0.0
          %623 = vmatprep.subr.mxu0 0.0
          %624 = vmatpush1.msra.mxu0 0.0
          %625 = vmatprep.subr.mxu0 0.0
          %626 = vmatpush1.msra.mxu0 0.0
          %627 = vmatprep.subr.mxu0 0.0
          %628 = vmatpush1.msra.mxu0 0.0
          %629 = vmatprep.subr.mxu0 0.0
          %630 = vmatpush1.msra.mxu0 0.0
          %631 = vmatprep.subr.mxu0 0.0
          %632 = vmatpush1.msra.mxu0 0.0
          %633 = vmatprep.mubr.f32.mxu0 0.0
          %634 = vmatmul.mubr.f32.gmra.mrb[0].mxu0 %v564
          %v635 = vpop.f32.mrb[0].mxu0
          %v636 = vadd.f32 0.0, %v635
          %v637 = vpop.f32.mrb[0].mxu0
          %638 = vmatprep.mubr.f32.mxu0 0.0
          %639 = vmatmul.mubr.f32.gmra.mrb[0].mxu0 %v567
          %v640 = vpop.f32.mrb[0].mxu0
          %v641 = vadd.f32 0.0, %v640
          %v642 = vpop.f32.mrb[0].mxu0
          %643 = vdwg.mxu0
          %v644 = vadd.f32 %v259, %v636
          %v645 = vadd.f32 %v260, %v641
        $region49: #{tpu_custom_call.1} parent=43 // loop_footer
          %s258 = sadd.s32 1, %s254
        $region50: #{tpu_custom_call.1} parent=43 // loop_footer_branch
          %253 = sbr.rel target = $region46
        $region51: #{tpu_custom_call.1} parent=43 // loop_exit
          _
        %v646 = vld [vmem:[%s4] sm:$0x1]
        %vm647 = vcmask 64512
        %v649 = vsel %vm647, %v259, 0
        %v652 = vsel %vm647, %v260, 0
        %654 = vmatprep.subr.mxu0 0.0
        %655 = vmatpush1.xpose.msra.mxu0 %v649
        %656 = vmatprep.subr.mxu0 0.0
        %657 = vmatpush1.xpose.msra.mxu0 %v652
        %658 = vmatprep.subr.mxu0 0.0
        %659 = vmatpush1.xpose.msra.mxu0 0.0
        %660 = vmatprep.subr.mxu0 0.0
        %661 = vmatpush1.xpose.msra.mxu0 0.0
        %662 = vmatprep.subr.mxu0 0.0
        %663 = vmatpush1.xpose.msra.mxu0 0.0
        %664 = vmatprep.subr.mxu0 0.0
        %665 = vmatpush1.xpose.msra.mxu0 0.0
        %666 = vmatprep.subr.mxu0 0.0
        %667 = vmatpush1.xpose.msra.mxu0 0.0
        %668 = vmatprep.subr.mxu0 0.0
        %669 = vmatpush1.xpose.msra.mxu0 0.0
        %670 = vmatprep.subr.mxu0 0.0
        %671 = vmatpush1.xpose.msra.mxu0 0.0
        %672 = vmatprep.subr.mxu0 0.0
        %673 = vmatpush1.xpose.msra.mxu0 0.0
        %674 = vmatprep.subr.mxu0 0.0
        %675 = vmatpush1.xpose.msra.mxu0 0.0
        %676 = vmatprep.subr.mxu0 0.0
        %677 = vmatpush1.xpose.msra.mxu0 0.0
        %678 = vmatprep.subr.mxu0 0.0
        %679 = vmatpush1.xpose.msra.mxu0 0.0
        %680 = vmatprep.subr.mxu0 0.0
        %681 = vmatpush1.xpose.msra.mxu0 0.0
        %682 = vmatprep.subr.mxu0 0.0
        %683 = vmatpush1.xpose.msra.mxu0 0.0
        %684 = vmatprep.subr.mxu0 0.0
        %685 = vmatpush1.xpose.msra.mxu0 0.0
        %686 = vmatprep.subr.mxu0 0.0
        %687 = vmatpush1.xpose.msra.mxu0 0.0
        %688 = vmatprep.subr.mxu0 0.0
        %689 = vmatpush1.xpose.msra.mxu0 0.0
        %690 = vmatprep.subr.mxu0 0.0
        %691 = vmatpush1.xpose.msra.mxu0 0.0
        %692 = vmatprep.subr.mxu0 0.0
        %693 = vmatpush1.xpose.msra.mxu0 0.0
        %694 = vmatprep.subr.mxu0 0.0
        %695 = vmatpush1.xpose.msra.mxu0 0.0
        %696 = vmatprep.subr.mxu0 0.0
        %697 = vmatpush1.xpose.msra.mxu0 0.0
        %698 = vmatprep.subr.mxu0 0.0
        %699 = vmatpush1.xpose.msra.mxu0 0.0
        %700 = vmatprep.subr.mxu0 0.0
        %701 = vmatpush1.xpose.msra.mxu0 0.0
        %702 = vmatprep.subr.mxu0 0.0
        %703 = vmatpush1.xpose.msra.mxu0 0.0
        %704 = vmatprep.subr.mxu0 0.0
        %705 = vmatpush1.xpose.msra.mxu0 0.0
        %706 = vmatprep.subr.mxu0 0.0
        %707 = vmatpush1.xpose.msra.mxu0 0.0
        %708 = vmatprep.subr.mxu0 0.0
        %709 = vmatpush1.xpose.msra.mxu0 0.0
        %710 = vmatprep.subr.mxu0 0.0
        %711 = vmatpush1.xpose.msra.mxu0 0.0
        %712 = vmatprep.subr.mxu0 0.0
        %713 = vmatpush1.xpose.msra.mxu0 0.0
        %714 = vmatprep.subr.mxu0 0.0
        %715 = vmatpush1.xpose.msra.mxu0 0.0
        %716 = vmatprep.subr.mxu0 0.0
        %717 = vmatpush1.xpose.msra.mxu0 0.0
        %718 = vmatprep.mubr.f32.mxu0 0.0
        %719 = vmatmul.mubr.f32.gmra.mrb[0].mxu0 %v649
        %v720 = vpop.f32.mrb[0].mxu0
        %v721 = vadd.f32 0.0, %v720
        %v722 = vpop.f32.mrb[0].mxu0
        %723 = vmatprep.mubr.f32.mxu0 0.0
        %724 = vmatmul.mubr.f32.gmra.mrb[0].mxu0 %v652
        %v725 = vpop.f32.mrb[0].mxu0
        %v726 = vadd.f32 0.0, %v725
        %v727 = vpop.f32.mrb[0].mxu0
        %728 = vdwg.mxu0
        %v729 = vmul.f32 %v721, %v251
        %v730 = vmul.f32 %v726, %v252
        %vm731 = vcmp.eq.f32.partialorder %v729, 0.0
        %vm732 = vcmp.eq.f32.partialorder %v730, 0.0
        %v733 = vsel %vm731, -1e+16, %v729
        %v734 = vsel %vm732, -1e+16, %v730
        %vm735 = vcmask 130048
        %v736 = vsel %vm735, %v733, -inf
        %737 = vmax.xlane.f32.xlu0 %v736
        %v738 = vpop.xlane.xlu0 %737
        %v739 = vsel %vm735, %v734, -inf
        %740 = vmax.xlane.f32.xlu0 %v739
        %v741 = vpop.xlane.xlu0 %740
        %v742 = vsub.f32 %v733, %v738
        %v743 = vsub.f32 %v734, %v741
        %v744 = vmul.f32 %v742, 1.442695
        %v745 = vpow.pop %v744
        %v746 = vmul.f32 %v743, 1.442695
        %v747 = vpow.pop %v746
        %v748 = vsel %vm735, %v745, 0.0
        %749 = vadd.xlane.f32.xlu0 %v748
        %v750 = vpop.xlane.xlu0 %749
        %v751 = vsel %vm735, %v747, 0.0
        %752 = vadd.xlane.f32.xlu0 %v751
        %v753 = vpop.xlane.xlu0 %752
        %v755 = vsel %vm735, %v745, 0
        %v758 = vsel %vm735, %v747, 0
        %760 = vmatprep.subr.mxu0 0.0
        %761 = vmatpush1.msra.mxu0 %v259
        %762 = vmatprep.subr.mxu0 0.0
        %763 = vmatpush1.msra.mxu0 %v260
        %764 = vmatprep.subr.mxu0 0.0
        %765 = vmatpush1.msra.mxu0 0.0
        %766 = vmatprep.subr.mxu0 0.0
        %767 = vmatpush1.msra.mxu0 0.0
        %768 = vmatprep.subr.mxu0 0.0
        %769 = vmatpush1.msra.mxu0 0.0
        %770 = vmatprep.subr.mxu0 0.0
        %771 = vmatpush1.msra.mxu0 0.0
        %772 = vmatprep.subr.mxu0 0.0
        %773 = vmatpush1.msra.mxu0 0.0
        %774 = vmatprep.subr.mxu0 0.0
        %775 = vmatpush1.msra.mxu0 0.0
        %776 = vmatprep.subr.mxu0 0.0
        %777 = vmatpush1.msra.mxu0 0.0
        %778 = vmatprep.subr.mxu0 0.0
        %779 = vmatpush1.msra.mxu0 0.0
        %780 = vmatprep.subr.mxu0 0.0
        %781 = vmatpush1.msra.mxu0 0.0
        %782 = vmatprep.subr.mxu0 0.0
        %783 = vmatpush1.msra.mxu0 0.0
        %784 = vmatprep.subr.mxu0 0.0
        %785 = vmatpush1.msra.mxu0 0.0
        %786 = vmatprep.subr.mxu0 0.0
        %787 = vmatpush1.msra.mxu0 0.0
        %788 = vmatprep.subr.mxu0 0.0
        %789 = vmatpush1.msra.mxu0 0.0
        %790 = vmatprep.subr.mxu0 0.0
        %791 = vmatpush1.msra.mxu0 0.0
        %792 = vmatprep.subr.mxu0 0.0
        %793 = vmatpush1.msra.mxu0 0.0
        %794 = vmatprep.subr.mxu0 0.0
        %795 = vmatpush1.msra.mxu0 0.0
        %796 = vmatprep.subr.mxu0 0.0
        %797 = vmatpush1.msra.mxu0 0.0
        %798 = vmatprep.subr.mxu0 0.0
        %799 = vmatpush1.msra.mxu0 0.0
        %800 = vmatprep.subr.mxu0 0.0
        %801 = vmatpush1.msra.mxu0 0.0
        %802 = vmatprep.subr.mxu0 0.0
        %803 = vmatpush1.msra.mxu0 0.0
        %804 = vmatprep.subr.mxu0 0.0
        %805 = vmatpush1.msra.mxu0 0.0
        %806 = vmatprep.subr.mxu0 0.0
        %807 = vmatpush1.msra.mxu0 0.0
        %808 = vmatprep.subr.mxu0 0.0
        %809 = vmatpush1.msra.mxu0 0.0
        %810 = vmatprep.subr.mxu0 0.0
        %811 = vmatpush1.msra.mxu0 0.0
        %812 = vmatprep.subr.mxu0 0.0
        %813 = vmatpush1.msra.mxu0 0.0
        %814 = vmatprep.subr.mxu0 0.0
        %815 = vmatpush1.msra.mxu0 0.0
        %816 = vmatprep.subr.mxu0 0.0
        %817 = vmatpush1.msra.mxu0 0.0
        %818 = vmatprep.subr.mxu0 0.0
        %819 = vmatpush1.msra.mxu0 0.0
        %820 = vmatprep.subr.mxu0 0.0
        %821 = vmatpush1.msra.mxu0 0.0
        %822 = vmatprep.subr.mxu0 0.0
        %823 = vmatpush1.msra.mxu0 0.0
        %824 = vmatprep.mubr.f32.mxu0 0.0
        %825 = vmatmul.mubr.f32.gmra.mrb[0].mxu0 %v755
        %v826 = vpop.f32.mrb[0].mxu0
        %v827 = vadd.f32 0.0, %v826
        %v828 = vpop.f32.mrb[0].mxu0
        %829 = vmatprep.mubr.f32.mxu0 0.0
        %830 = vmatmul.mubr.f32.gmra.mrb[0].mxu0 %v758
        %v831 = vpop.f32.mrb[0].mxu0
        %v832 = vadd.f32 0.0, %v831
        %v833 = vpop.f32.mrb[0].mxu0
        %834 = vdwg.mxu0
        %v835 = vrcp.pop %v750
        %v836 = vrcp.pop %v753
        %v837 = vmul.f32 %v750, %v835
        %v838 = vmul.f32 %v753, %v836
        %v839 = vsub.f32 2.0, %v837
        %v840 = vsub.f32 2.0, %v838
        %v841 = vmul.f32 %v835, %v839
        %v842 = vmul.f32 %v836, %v840
        %v843 = vmul.f32 %v827, %v841
        %v844 = vmul.f32 %v832, %v842
        %v846 = vlaneseq
        %v847 = vshrl.u32 %v846, 7
        %v848 = vsub.s32 0, %v847
        %v849 = vrot.slane %v646, %v848
        %v851 = vadd.f32 %v843, %v849
        %v852 = vadd.f32 %v844, %v849
        %vm853 = vcmp.ge.f32.partialorder %v851, 0.0
        %vm854 = vcmp.ge.f32.partialorder %v852, 0.0
        %v855 = vmul.f32 %v851, 0.01
        %v856 = vmul.f32 %v852, 0.01
        %v857 = vsel %vm853, %v851, %v855
        %v858 = vsel %vm854, %v852, %v856
        %v859 = vcombine.high %v857, 0.0
        %v861 = vunpack.c.l.s4 1983009808
        %v862 = vunpack.c.0.s8 %v861
        %v863 = vlaneseq
        %v864 = vshrl.u32 %v863, 7
        %v865 = vsub.s32 %v862, %v864
        %v866 = vrot.slane %v857, %v865
        %v868 = vunpack.c.l.s4 1983009808
        %v869 = vunpack.c.0.s8 %v868
        %v870 = vlaneseq
        %v871 = vshrl.u32 %v870, 7
        %v872 = vsub.s32 %v869, %v871
        %v873 = vrot.slane %v859, %v872
        %v874 = vcombine.high %v866, 0.0
        %v876 = vunpack.c.l.s4 1934713408
        %v877 = vunpack.c.0.s8 %v876
        %v878 = vlaneseq
        %v879 = vshrl.u32 %v878, 7
        %v880 = vsub.s32 %v877, %v879
        %v881 = vrot.slane %v866, %v880
        %v883 = vunpack.c.l.s4 1934713408
        %v884 = vunpack.c.0.s8 %v883
        %v885 = vlaneseq
        %v886 = vshrl.u32 %v885, 7
        %v887 = vsub.s32 %v884, %v886
        %v888 = vrot.slane %v874, %v887
        %v889 = vcombine.high %v873, 0.0
        %v891 = vunpack.c.l.s4 1934713408
        %v892 = vunpack.c.0.s8 %v891
        %v893 = vlaneseq
        %v894 = vshrl.u32 %v893, 7
        %v895 = vsub.s32 %v892, %v894
        %v896 = vrot.slane %v873, %v895
        %v898 = vunpack.c.l.s4 1934713408
        %v899 = vunpack.c.0.s8 %v898
        %v900 = vlaneseq
        %v901 = vshrl.u32 %v900, 7
        %v902 = vsub.s32 %v899, %v901
        %v903 = vrot.slane %v889, %v902
        %v904 = vcombine.high %v881, 0.0
        %v905 = vcombine.high %v888, 0.0
        %v906 = vcombine.high %v896, 0.0
        %v907 = vcombine.high %v903, 0.0
        %v908 = vcombine.high %v858, 0.0
        %v910 = vunpack.c.l.s4 1983009808
        %v911 = vunpack.c.0.s8 %v910
        %v912 = vlaneseq
        %v913 = vshrl.u32 %v912, 7
        %v914 = vsub.s32 %v911, %v913
        %v915 = vrot.slane %v858, %v914
        %v917 = vunpack.c.l.s4 1983009808
        %v918 = vunpack.c.0.s8 %v917
        %v919 = vlaneseq
        %v920 = vshrl.u32 %v919, 7
        %v921 = vsub.s32 %v918, %v920
        %v922 = vrot.slane %v908, %v921
        %v923 = vcombine.high %v915, 0.0
        %v925 = vunpack.c.l.s4 1934713408
        %v926 = vunpack.c.0.s8 %v925
        %v927 = vlaneseq
        %v928 = vshrl.u32 %v927, 7
        %v929 = vsub.s32 %v926, %v928
        %v930 = vrot.slane %v915, %v929
        %v932 = vunpack.c.l.s4 1934713408
        %v933 = vunpack.c.0.s8 %v932
        %v934 = vlaneseq
        %v935 = vshrl.u32 %v934, 7
        %v936 = vsub.s32 %v933, %v935
        %v937 = vrot.slane %v923, %v936
        %v938 = vcombine.high %v922, 0.0
        %v940 = vunpack.c.l.s4 1934713408
        %v941 = vunpack.c.0.s8 %v940
        %v942 = vlaneseq
        %v943 = vshrl.u32 %v942, 7
        %v944 = vsub.s32 %v941, %v943
        %v945 = vrot.slane %v922, %v944
        %v947 = vunpack.c.l.s4 1934713408
        %v948 = vunpack.c.0.s8 %v947
        %v949 = vlaneseq
        %v950 = vshrl.u32 %v949, 7
        %v951 = vsub.s32 %v948, %v950
        %v952 = vrot.slane %v938, %v951
        %v953 = vcombine.high %v930, 0.0
        %v954 = vcombine.high %v937, 0.0
        %v955 = vcombine.high %v945, 0.0
        %v956 = vcombine.high %v952, 0.0
        %958 = vrot.lane.b32.xlu0 %v904, 8
        %v959 = vpop.permute.xlu0 %958
        %962 = vrot.lane.b32.xlu0 %v888, 16
        %v963 = vpop.permute.xlu0 %962
        %966 = vrot.lane.b32.xlu0 %v905, 24
        %v967 = vpop.permute.xlu0 %966
        %970 = vrot.lane.b32.xlu0 %v896, 32
        %v971 = vpop.permute.xlu0 %970
        %974 = vrot.lane.b32.xlu0 %v906, 40
        %v975 = vpop.permute.xlu0 %974
        %978 = vrot.lane.b32.xlu0 %v903, 48
        %v979 = vpop.permute.xlu0 %978
        %982 = vrot.lane.b32.xlu0 %v907, 56
        %v983 = vpop.permute.xlu0 %982
        %986 = vrot.lane.b32.xlu0 %v930, 64
        %v987 = vpop.permute.xlu0 %986
        %990 = vrot.lane.b32.xlu0 %v953, 72
        %v991 = vpop.permute.xlu0 %990
        %994 = vrot.lane.b32.xlu0 %v937, 80
        %v995 = vpop.permute.xlu0 %994
        %998 = vrot.lane.b32.xlu0 %v954, 88
        %v999 = vpop.permute.xlu0 %998
        %1002 = vrot.lane.b32.xlu0 %v945, 96
        %v1003 = vpop.permute.xlu0 %1002
        %1006 = vrot.lane.b32.xlu0 %v955, 104
        %v1007 = vpop.permute.xlu0 %1006
        %1010 = vrot.lane.b32.xlu0 %v952, 112
        %v1011 = vpop.permute.xlu0 %1010
        %1014 = vrot.lane.b32.xlu0 %v956, 120
        %v1015 = vpop.permute.xlu0 %1014
        %v1017 = vsel %vm647, %v881, %v959
        %v1018 = vsel %vm735, %v1017, %v963
        %vm1019 = vcmask 195584
        %v1020 = vsel %vm1019, %v1018, %v967
        %vm1021 = vcmask 261120
        %v1022 = vsel %vm1021, %v1020, %v971
        %vm1023 = vcmask 326656
        %v1024 = vsel %vm1023, %v1022, %v975
        %vm1025 = vcmask 392192
        %v1026 = vsel %vm1025, %v1024, %v979
        %vm1027 = vcmask 457728
        %v1028 = vsel %vm1027, %v1026, %v983
        %vm1029 = vcmask 523264
        %v1030 = vsel %vm1029, %v1028, %v987
        %vm1031 = vcmask 588800
        %v1032 = vsel %vm1031, %v1030, %v991
        %vm1033 = vcmask 654336
        %v1034 = vsel %vm1033, %v1032, %v995
        %vm1035 = vcmask 719872
        %v1036 = vsel %vm1035, %v1034, %v999
        %vm1037 = vcmask 785408
        %v1038 = vsel %vm1037, %v1036, %v1003
        %vm1039 = vcmask 850944
        %v1040 = vsel %vm1039, %v1038, %v1007
        %vm1041 = vcmask 916480
        %v1042 = vsel %vm1041, %v1040, %v1011
        %vm1043 = vcmask 982016
        %v1044 = vsel %vm1043, %v1042, %v1015
        %1045 = vst [vmem:[%s243] sm:$0x1] %v1044
        %s1046 = sand.u32 %s159, 1
        %s1047 = scalar_lea.sflag [#allocation3], %s1046
        %s1048 = sand.u32 %s159, 1
        %s1049 = scalar_lea.vmem [#allocation2], %s1048
        // Predicated region
        $region52: #{tpu_custom_call.1} parent=43 // pred_check
          %p1050 = pneg %p169
        $region53: #{tpu_custom_call.1} parent=43 // pred_check_branch
          %1052 = sbr.rel (%p1050) target = $region55
        $region54: #{tpu_custom_call.1} parent=43 // pred_region
          %s1054 = ssub.s32 16, 16
          %1055 = vsyncadd %s1047, %s1054
          %s1056 = smul.addr %s20, 16
          %s1057 = scalar_lea.hbm %s6, %s1056
          %s1059 = sshll.u32 %s1049, 4
          %s1060 = int_to_ptr.vmem [resolvable:$true] %s1059
          %1062 = dma.vmem_to_hbm [thread:$0]  %s1060, 16, %s1057, %s1047
        $region55: #{tpu_custom_call.1} parent=43 // pred_fallthru
          _
      $region44: #{tpu_custom_call.1} parent=5 // pred_fallthru
        _
      %p1063 = scmp.le.s32.totalorder 2, %s15
      // Predicated region
      $region56: #{tpu_custom_call.1} parent=5 // pred_check
        %p1064 = pneg %p1063
      $region57: #{tpu_custom_call.1} parent=5 // pred_check_branch
        %1066 = sbr.rel (%p1064) target = $region59
      $region58: #{tpu_custom_call.1} parent=5 // pred_region
        %s1067 = ssub.s32 %s15, 2
        // Predicated region
        $region60: #{tpu_custom_call.1} parent=58 // pred_check
          %p1068 = pneg %p175
        $region61: #{tpu_custom_call.1} parent=58 // pred_check_branch
          %1070 = sbr.rel (%p1068) target = $region63
        $region62: #{tpu_custom_call.1} parent=58 // pred_region
          %s1071 = sand.u32 %s160, 1
          %s1072 = scalar_lea.sflag [#allocation3], %s1071
          %s1073 = sand.u32 %s160, 1
          %s1074 = scalar_lea.vmem [#allocation2], %s1073
          %1075 = dma.done %s1072, 16
        $region63: #{tpu_custom_call.1} parent=58 // pred_fallthru
          _
      $region59: #{tpu_custom_call.1} parent=5 // pred_fallthru
        _
    $region6: #{tpu_custom_call.1} parent=1 // loop_footer
      %s19 = sadd.s32 1, %s15
    $region7: #{tpu_custom_call.1} parent=1 // loop_footer_branch
      %14 = sbr.rel target = $region3
    $region8: #{tpu_custom_call.1} parent=1 // loop_exit
      _
    %1076 = vsyncpa [#allocation3], 1
    %s1077 = scalar_lea.sflag [#allocation3], 1
    %1078 = vsyncpa %s1077, 1

</llo_original>
